<compile_context>
chip_gen: v7x
topology: tpu7x:2x2x1
jax: 0.10.0
libtpu: 0.0.40
codegen_flags: <defaults>
</compile_context>

<pallas_src>
import jax
import jax.numpy as jnp
from jax.experimental import pallas as pl
from jax.experimental.pallas import tpu as pltpu


def _patch_embed_kernel(x_ref, w_ref, b_ref, o_ref):
    # x_ref: (TM, Kp)  bf16 patch tile (streamed per grid step)
    # w_ref: (Kp, Dp)  bf16 projection weight (resident across the grid)
    # b_ref: (1,  Dp)  f32 bias (resident)
    # o_ref: (TM, Dp)  output tile (lane-dense)
    acc = jnp.dot(x_ref[...], w_ref[...], preferred_element_type=jnp.float32)
    o_ref[...] = (acc + b_ref[...]).astype(o_ref.dtype)


def _round_up(a, m):
    return ((a + m - 1) // m) * m


def _pick_tile_m(M, block_m):
    """Pick an M tile: largest multiple of 16 <= block_m that divides M.

    Exact divisors avoid materializing a zero-padded copy of the (M, K)
    patch matrix (saves one full HBM read+write of the activations).
    Returns (TM, Mp)."""
    cap = min(block_m, M)
    for t in range(cap - cap % 16, 0, -16):
        if M % t == 0:
            return t, M
    # No nice divisor: fall back to a single padded-grid layout.
    t = min(block_m, _round_up(M, 16))
    return t, _round_up(M, t)


def patch_embed(x, weight, bias, patch_size, flatten=True, *,
                compute_dtype=jnp.bfloat16, block_m=512):
    """Forward pass of PatchEmbed.

    x:      (B, C, H, W)   NCHW, like the PyTorch module
    weight: (D, C, p, p)   nn.Conv2d weight (OIHW)
    bias:   (D,)           nn.Conv2d bias
    returns (B, num_patches, D) if flatten else (B, D, gh, gw)
    """
    B, C, H, W = x.shape
    p = patch_size
    D = weight.shape[0]
    assert H % p == 0 and W % p == 0, "image size must match patch grid"
    gh, gw = H // p, W // p
    num_patches = gh * gw
    K = C * p * p
    M = B * num_patches
    out_dtype = x.dtype

    # Cast to the (narrow) compute dtype BEFORE the layout transpose so the
    # pure-plumbing HBM round trip moves half the bytes.
    x_c = x.astype(compute_dtype)
    # (B,C,H,W) -> (B, gh, gw, C, p, p) -> (M, K); inner (C, ph, pw) ordering
    # matches the Conv2d weight reshape below.
    patches = x_c.reshape(B, C, gh, p, gw, p)
    patches = patches.transpose(0, 2, 4, 1, 3, 5).reshape(M, K)

    w_mat = weight.reshape(D, K).T.astype(compute_dtype)   # (K, D)
    b_mat = bias.reshape(1, D).astype(jnp.float32)         # (1, D)

    # Pad lane (last) dims to multiples of 128 for unmasked vector access.
    Kp = _round_up(K, 128)
    Dp = _round_up(D, 128)
    TM, Mp = _pick_tile_m(M, block_m)

    if Kp != K:
        patches = jnp.pad(patches, ((0, 0), (0, Kp - K)))
        w_mat = jnp.pad(w_mat, ((0, Kp - K), (0, 0)))
    if Dp != D:
        w_mat = jnp.pad(w_mat, ((0, 0), (0, Dp - D)))
        b_mat = jnp.pad(b_mat, ((0, 0), (0, Dp - D)))
    if Mp != M:
        patches = jnp.pad(patches, ((0, Mp - M), (0, 0)))

    # VMEM budget: double-buffered streamed tiles + resident weight/bias,
    # plus slack; clamp to stay safely under v7x's 64 MiB physical VMEM.
    out_bytes = jnp.dtype(out_dtype).itemsize
    vmem_est = (2 * TM * Kp * 2            # input patch tiles (bf16, 2 bufs)
                + 2 * TM * Dp * out_bytes  # output tiles (2 bufs)
                + Kp * Dp * 2 + Dp * 4     # resident weight (bf16) + bias (f32)
                + (4 << 20))               # compiler scratch / headroom
    vmem_limit = int(min(max(vmem_est, 8 << 20), 48 << 20))

    out_padded = pl.pallas_call(
        _patch_embed_kernel,
        out_shape=jax.ShapeDtypeStruct((Mp, Dp), out_dtype),
        grid_spec=pltpu.PrefetchScalarGridSpec(
            num_scalar_prefetch=0,
            grid=(Mp // TM,),
            in_specs=[
                pl.BlockSpec((TM, Kp), lambda i: (i, 0)),   # streamed patch tiles
                pl.BlockSpec((Kp, Dp), lambda i: (0, 0)),   # weight: resident, DMA'd once
                pl.BlockSpec((1, Dp), lambda i: (0, 0)),    # bias: resident
            ],
            out_specs=pl.BlockSpec((TM, Dp), lambda i: (i, 0)),
        ),
        compiler_params=pltpu.CompilerParams(
            dimension_semantics=("parallel",),              # megacore-shardable on v7x
            vmem_limit_bytes=vmem_limit,
        ),
    )(patches, w_mat, b_mat)

    out = out_padded[:M, :D].reshape(B, num_patches, D)     # == flatten(2).transpose(1,2)
    if not flatten:
        out = out.reshape(B, gh, gw, D).transpose(0, 3, 1, 2)
    # norm_layer=None -> nn.Identity()
    return out


def _reference(x, weight, bias, patch_size):
    # Pure-JAX reference using conv_general_dilated (== nn.Conv2d, NCHW/OIHW).
    y = jax.lax.conv_general_dilated(
        x, weight,
        window_strides=(patch_size, patch_size),
        padding="VALID",
        dimension_numbers=("NCHW", "OIHW", "NCHW"),
    ) + bias.reshape(1, -1, 1, 1)
    B, D, gh, gw = y.shape
    return y.reshape(B, D, gh * gw).transpose(0, 2, 1)


if __name__ == "__main__":
    # Small shapes consistent with the module: img_size=16, patch_size=4,
    # in_chans=4, embed_dim=32, batch=2 -> num_patches = 16.
    B, C, H, W = 2, 4, 16, 16
    patch_size = 4
    embed_dim = 32

    key = jax.random.PRNGKey(0)
    kx, kw, kb = jax.random.split(key, 3)
    x = jax.random.normal(kx, (B, C, H, W), dtype=jnp.float32)
    # Deterministic synthetic parameters (shapes from nn.Conv2d in __init__).
    weight = jax.random.normal(kw, (embed_dim, C, patch_size, patch_size),
                               dtype=jnp.float32) * 0.02
    bias = jax.random.normal(kb, (embed_dim,), dtype=jnp.float32) * 0.02

    out = patch_embed(x, weight, bias, patch_size, flatten=True)
    out = jax.block_until_ready(out)

    ref = _reference(x, weight, bias, patch_size)
    assert out.shape == (B, (H // patch_size) * (W // patch_size), embed_dim)
    # bf16 operands with f32 accumulation -> loosened tolerance vs f32 reference.
    assert jnp.allclose(out, ref, atol=2e-2, rtol=2e-2), "mismatch vs reference"

    print("KERNEL_OK")
</pallas_src>

<mosaic_0001>
module attributes {stable_mosaic.version = 11 : i64} {
  func.func @_patch_embed_kernel(%arg0: i32, %arg1: memref<32x128xbf16, #tpu.memory_space<vmem>>, %arg2: memref<128x128xbf16, #tpu.memory_space<vmem>>, %arg3: memref<1x128xf32, #tpu.memory_space<vmem>>, %arg4: memref<32x128xf32, #tpu.memory_space<vmem>>) attributes {dimension_semantics = [#tpu.dimension_semantics<parallel>], iteration_bounds = array<i64: 1>, scalar_prefetch = 0 : i64, scratch_operands = 0 : i64, tpu.core_type = #tpu.core_type<tc>, window_params = [{transform_indices = @transform_0, window_bounds = array<i64: 32, 128>}, {pipeline_mode = #tpu.pipeline_mode<synchronous>, transform_indices = @transform_1, window_bounds = array<i64: 128, 128>}, {pipeline_mode = #tpu.pipeline_mode<synchronous>, transform_indices = @transform_2, window_bounds = array<i64: 1, 128>}, {transform_indices = @transform_3, window_bounds = array<i64: 32, 128>}]} {
    %c0 = arith.constant 0 : index
    %c0_0 = arith.constant 0 : index
    %0 = vector.load %arg1[%c0, %c0_0] : memref<32x128xbf16, #tpu.memory_space<vmem>>, vector<32x128xbf16>
    %c0_1 = arith.constant 0 : index
    %c0_2 = arith.constant 0 : index
    %1 = vector.load %arg2[%c0_1, %c0_2] : memref<128x128xbf16, #tpu.memory_space<vmem>>, vector<128x128xbf16>
    %cst = arith.constant dense<0.000000e+00> : vector<32x128xf32>
    %2 = tpu.matmul %0, %1, %cst {dimension_numbers = #tpu.dot_dimension_numbers<[1], [0], [0], [1], [0, 0, 1, 1], [], []>} : vector<32x128xbf16>, vector<128x128xbf16>, vector<32x128xf32> -> vector<32x128xf32>
    %c0_3 = arith.constant 0 : index
    %c0_4 = arith.constant 0 : index
    %3 = vector.load %arg3[%c0_3, %c0_4] : memref<1x128xf32, #tpu.memory_space<vmem>>, vector<1x128xf32>
    %4 = vector.broadcast %3 : vector<1x128xf32> to vector<32x128xf32>
    %5 = arith.addf %2, %4 : vector<32x128xf32>
    %c0_5 = arith.constant 0 : index
    %c0_6 = arith.constant 0 : index
    %6 = vector.load %arg4[%c0_5, %c0_6] : memref<32x128xf32, #tpu.memory_space<vmem>>, vector<32x128xf32>
    tpu.vector_store %arg4[%c0_5, %c0_6], %5 {strides = array<i32>} : memref<32x128xf32, #tpu.memory_space<vmem>>, vector<32x128xf32>,
    return
  }
  func.func @transform_0(%arg0: i32) -> (i32, i32) {
    %c0_i32 = arith.constant 0 : i32
    %c0_i32_0 = arith.constant 0 : i32
    return %arg0, %c0_i32 : i32, i32
  }
  func.func @transform_1(%arg0: i32) -> (i32, i32) {
    %c0_i32 = arith.constant 0 : i32
    %c0_i32_0 = arith.constant 0 : i32
    %c0_i32_1 = arith.constant 0 : i32
    return %c0_i32, %c0_i32_0 : i32, i32
  }
  func.func @transform_2(%arg0: i32) -> (i32, i32) {
    %c0_i32 = arith.constant 0 : i32
    %c0_i32_0 = arith.constant 0 : i32
    %c0_i32_1 = arith.constant 0 : i32
    return %c0_i32, %c0_i32_0 : i32, i32
  }
  func.func @transform_3(%arg0: i32) -> (i32, i32) {
    %c0_i32 = arith.constant 0 : i32
    %c0_i32_0 = arith.constant 0 : i32
    return %arg0, %c0_i32 : i32, i32
  }
}

</mosaic_0001>

<llo_original>
// kernel: tpu_custom_call.1
$region0: #{tpu_custom_call.1}
  #allocation0 [shape = 'u32[]', space=smem, size = 0x4, offset = 0x4, fixed_abs, tag = 'smem constant byte address 0x4 - core index']
  #allocation1 [shape = 'u32[144,128]{1,0:T(1,128)}', space=vmem, size = 0x12000, scoped, tag = 'internal scratch']
  %s0 = inlined_call_operand.hbm [shape: bf16[32,128], index: 0, kind: input, shape index: {}]
  %s1 = inlined_call_operand.hbm [shape: bf16[128,128], index: 1, kind: input, shape index: {}]
  %s2 = inlined_call_operand.vmem [shape: f32[1,128], index: 2, kind: input, shape index: {}]
  %s3 = inlined_call_operand.hbm [shape: f32[32,128], index: 3, kind: output, shape index: {}]
  %s4 = sld [smem:[#allocation0]]
  $region30: #{tpu_custom_call.1} parent=0
    _
  %s6 = ssub.s32 1, %s4
  %s7 = scalar_select 0, %s6, %s4
  $region1: #{tpu_custom_call.1} parent=0
    #allocation2 [shape = 'u8[8192]{0}', space=vmem, size = 0x2000, scoped, tag = 'input window, operand 0, single buffered']
    #allocation3 [shape = 's32[1]{0}', space=sflag, size = 0x4, scoped, tag = 'scoped memory for tpu_custom_call.1']
    #allocation4 [shape = 's32[1]{0}', space=sflag, size = 0x4, scoped, tag = 'scoped memory for tpu_custom_call.1']
    #allocation5 [shape = 'u8[32768]{0}', space=vmem, size = 0x8000, scoped, tag = 'input window, operand 1, single buffered']
    #allocation6 [shape = 's32[1]{0}', space=sflag, size = 0x4, scoped, tag = 'scoped memory for tpu_custom_call.1']
    #allocation7 [shape = 'u8[16384]{0}', space=vmem, size = 0x4000, scoped, tag = 'output window, operand 0, single buffered']
    %8 = vsyncpa [#allocation3], 0
    %9 = vsyncpa [#allocation6], 0
    %10 = vsyncpa [#allocation4], 0
    // Predicated region
    $region2: #{tpu_custom_call.1} parent=1 // pred_check
      _
    $region3: #{tpu_custom_call.1} parent=1 // pred_check_branch
      %12 = sbr.rel (0) target = $region5
    $region4: #{tpu_custom_call.1} parent=1 // pred_region
      %s14 = ssub.s32 256, 256
      %15 = vsyncadd [#allocation3], %s14
      %s16 = sshll.u32 [#allocation2], 4
      %s17 = int_to_ptr.vmem [resolvable:$true] %s16
      %22 = dma.hbm_to_vmem [thread:$0]  %s0, 256, %s17, [#allocation3], 64, 64, 4
    $region5: #{tpu_custom_call.1} parent=1 // pred_fallthru
      _
    // Predicated region
    $region6: #{tpu_custom_call.1} parent=1 // pred_check
      _
    $region7: #{tpu_custom_call.1} parent=1 // pred_check_branch
      %24 = sbr.rel (0) target = $region9
    $region8: #{tpu_custom_call.1} parent=1 // pred_region
      %s26 = ssub.s32 1024, 1024
      %27 = vsyncadd [#allocation6], %s26
      %s28 = sshll.u32 [#allocation5], 4
      %s29 = int_to_ptr.vmem [resolvable:$true] %s28
      %34 = dma.hbm_to_vmem [thread:$0]  %s1, 1024, %s29, [#allocation6], 64, 64, 4
    $region9: #{tpu_custom_call.1} parent=1 // pred_fallthru
      _
    // Predicated region
    $region10: #{tpu_custom_call.1} parent=1 // pred_check
      _
    $region11: #{tpu_custom_call.1} parent=1 // pred_check_branch
      %36 = sbr.rel (0) target = $region13
    $region12: #{tpu_custom_call.1} parent=1 // pred_region
      _
    $region13: #{tpu_custom_call.1} parent=1 // pred_fallthru
      _
    // Predicated region
    $region14: #{tpu_custom_call.1} parent=1 // pred_check
      _
    $region15: #{tpu_custom_call.1} parent=1 // pred_check_branch
      %38 = sbr.rel (0) target = $region17
    $region16: #{tpu_custom_call.1} parent=1 // pred_region
      %39 = dma.done [#allocation3], 256
    $region17: #{tpu_custom_call.1} parent=1 // pred_fallthru
      _
    // Predicated region
    $region18: #{tpu_custom_call.1} parent=1 // pred_check
      _
    $region19: #{tpu_custom_call.1} parent=1 // pred_check_branch
      %41 = sbr.rel (0) target = $region21
    $region20: #{tpu_custom_call.1} parent=1 // pred_region
      %42 = dma.done [#allocation6], 1024
    $region21: #{tpu_custom_call.1} parent=1 // pred_fallthru
      _
    %v44 = vld [vmem:[#allocation2] sm:$0xf]
    %v45 = vld [vmem:[#allocation2 + $0x4] sm:$0xf]
    %v46 = vld [vmem:[#allocation2 + $0x8] sm:$0xf]
    %v47 = vld [vmem:[#allocation2 + $0xc] sm:$0xf]
    %v48 = vld [vmem:[#allocation5] sm:$0xf]
    %v49 = vld [vmem:[#allocation5 + $0x4] sm:$0xf]
    %v50 = vld [vmem:[#allocation5 + $0x8] sm:$0xf]
    %v51 = vld [vmem:[#allocation5 + $0xc] sm:$0xf]
    %v52 = vld [vmem:[#allocation5 + $0x10] sm:$0xf]
    %v53 = vld [vmem:[#allocation5 + $0x14] sm:$0xf]
    %v54 = vld [vmem:[#allocation5 + $0x18] sm:$0xf]
    %v55 = vld [vmem:[#allocation5 + $0x1c] sm:$0xf]
    %v56 = vld [vmem:[#allocation5 + $0x20] sm:$0xf]
    %v57 = vld [vmem:[#allocation5 + $0x24] sm:$0xf]
    %v58 = vld [vmem:[#allocation5 + $0x28] sm:$0xf]
    %v59 = vld [vmem:[#allocation5 + $0x2c] sm:$0xf]
    %v60 = vld [vmem:[#allocation5 + $0x30] sm:$0xf]
    %v61 = vld [vmem:[#allocation5 + $0x34] sm:$0xf]
    %v62 = vld [vmem:[#allocation5 + $0x38] sm:$0xf]
    %v63 = vld [vmem:[#allocation5 + $0x3c] sm:$0xf]
    %v64 = vld [vmem:[%s2] sm:$0x1]
    %v66 = vlaneseq
    %v67 = vshrl.u32 %v66, 7
    %v68 = vsub.s32 0, %v67
    %v69 = vrot.slane %v64, %v68
    %v75 = vunpack.c.l.b16 %v44
    %v76 = vunpack.c.l.b16 %v45
    %v77 = vunpack.c.l.b16 %v46
    %v78 = vunpack.c.l.b16 %v47
    %v79 = vpack.c.b16 %v76, %v75
    %v80 = vpack.c.b16 %v78, %v77
    %v99 = vunpack.c.l.b16 %v48
    %v100 = vunpack.c.l.b16 %v49
    %v101 = vunpack.c.l.b16 %v50
    %v102 = vunpack.c.l.b16 %v51
    %v103 = vunpack.c.l.b16 %v52
    %v104 = vunpack.c.l.b16 %v53
    %v105 = vunpack.c.l.b16 %v54
    %v106 = vunpack.c.l.b16 %v55
    %v107 = vunpack.c.l.b16 %v56
    %v108 = vunpack.c.l.b16 %v57
    %v109 = vunpack.c.l.b16 %v58
    %v110 = vunpack.c.l.b16 %v59
    %v111 = vunpack.c.l.b16 %v60
    %v112 = vunpack.c.l.b16 %v61
    %v113 = vunpack.c.l.b16 %v62
    %v114 = vunpack.c.l.b16 %v63
    %v115 = vpack.c.b16 %v100, %v99
    %v116 = vpack.c.b16 %v102, %v101
    %v117 = vpack.c.b16 %v104, %v103
    %v118 = vpack.c.b16 %v106, %v105
    %v119 = vpack.c.b16 %v108, %v107
    %v120 = vpack.c.b16 %v110, %v109
    %v121 = vpack.c.b16 %v112, %v111
    %v122 = vpack.c.b16 %v114, %v113
    %131 = vmatprep.subr.bf16.mxu0 0
    %132 = vmatpush1.bf16.msra.mxu0 %v115
    %133 = vmatprep.subr.bf16.mxu0 0
    %134 = vmatpush1.bf16.msra.mxu0 %v116
    %135 = vmatprep.subr.bf16.mxu0 0
    %136 = vmatpush1.bf16.msra.mxu0 %v117
    %137 = vmatprep.subr.bf16.mxu0 0
    %138 = vmatpush1.bf16.msra.mxu0 %v118
    %139 = vmatprep.subr.bf16.mxu0 0
    %140 = vmatpush1.bf16.msra.mxu0 %v119
    %141 = vmatprep.subr.bf16.mxu0 0
    %142 = vmatpush1.bf16.msra.mxu0 %v120
    %143 = vmatprep.subr.bf16.mxu0 0
    %144 = vmatpush1.bf16.msra.mxu0 %v121
    %145 = vmatprep.subr.bf16.mxu0 0
    %146 = vmatpush1.bf16.msra.mxu0 %v122
    %147 = vmatprep.subr.bf16.mxu0 0
    %148 = vmatpush1.bf16.msra.mxu0 0
    %149 = vmatprep.subr.bf16.mxu0 0
    %150 = vmatpush1.bf16.msra.mxu0 0
    %151 = vmatprep.subr.bf16.mxu0 0
    %152 = vmatpush1.bf16.msra.mxu0 0
    %153 = vmatprep.subr.bf16.mxu0 0
    %154 = vmatpush1.bf16.msra.mxu0 0
    %155 = vmatprep.subr.bf16.mxu0 0
    %156 = vmatpush1.bf16.msra.mxu0 0
    %157 = vmatprep.subr.bf16.mxu0 0
    %158 = vmatpush1.bf16.msra.mxu0 0
    %159 = vmatprep.subr.bf16.mxu0 0
    %160 = vmatpush1.bf16.msra.mxu0 0
    %161 = vmatprep.subr.bf16.mxu0 0
    %162 = vmatpush1.bf16.msra.mxu0 0
    %163 = vmatprep.mubr.bf16.mxu0 0
    %164 = vmatmul.mubr.bf16.gmra.mrb[0].mxu0 %v79
    %v165 = vpop.f32.mrb[0].mxu0
    %v166 = vadd.f32 %v69, %v165
    %v167 = vpop.f32.mrb[0].mxu0
    %v168 = vpop.f32.mrb[0].mxu0
    %v169 = vadd.f32 %v69, %v168
    %v170 = vpop.f32.mrb[0].mxu0
    %171 = vmatprep.mubr.bf16.mxu0 0
    %172 = vmatmul.mubr.bf16.gmra.mrb[0].mxu0 %v80
    %v173 = vpop.f32.mrb[0].mxu0
    %v174 = vadd.f32 %v69, %v173
    %v175 = vpop.f32.mrb[0].mxu0
    %v176 = vpop.f32.mrb[0].mxu0
    %v177 = vadd.f32 %v69, %v176
    %v178 = vpop.f32.mrb[0].mxu0
    %179 = vdwg.mxu0
    %180 = vst [vmem:[#allocation7] sm:$0xff] %v166
    %181 = vst [vmem:[#allocation7 + $0x8] sm:$0xff] %v169
    %182 = vst [vmem:[#allocation7 + $0x10] sm:$0xff] %v174
    %183 = vst [vmem:[#allocation7 + $0x18] sm:$0xff] %v177
    // Predicated region
    $region22: #{tpu_custom_call.1} parent=1 // pred_check
      _
    $region23: #{tpu_custom_call.1} parent=1 // pred_check_branch
      %185 = sbr.rel (0) target = $region25
    $region24: #{tpu_custom_call.1} parent=1 // pred_region
      %s187 = ssub.s32 512, 512
      %188 = vsyncadd [#allocation4], %s187
      %s189 = sshll.u32 [#allocation7], 4
      %s190 = int_to_ptr.vmem [resolvable:$true] %s189
      %195 = dma.vmem_to_hbm [thread:$0]  %s190, 512, %s3, [#allocation4], 128, 128, 8
    $region25: #{tpu_custom_call.1} parent=1 // pred_fallthru
      _
    // Predicated region
    $region26: #{tpu_custom_call.1} parent=1 // pred_check
      _
    $region27: #{tpu_custom_call.1} parent=1 // pred_check_branch
      %197 = sbr.rel (0) target = $region29
    $region28: #{tpu_custom_call.1} parent=1 // pred_region
      %198 = dma.done [#allocation4], 512
    $region29: #{tpu_custom_call.1} parent=1 // pred_fallthru
      _
    %199 = vsyncpa [#allocation3], 1
    %200 = vsyncpa [#allocation6], 1
    %201 = vsyncpa [#allocation4], 1

</llo_original>
